<compile_context>
chip_gen: v5e
topology: v5e:2x2
jax: 0.10.0
libtpu: 0.0.40
codegen_flags: <defaults>
</compile_context>

<pallas_src>
import functools

import jax
import jax.numpy as jnp
from jax.experimental import pallas as pl
from jax.experimental.pallas import tpu as pltpu


def _round_up(x, m):
    return (x + m - 1) // m * m


def _fusion_mlp_kernel(act_ref, attr_ref, w1_ref, b1_ref, w2_ref, b2_ref,
                       o_ref, *, da):
    """out = relu(act@W1[:da] + attr@W1[da:] + b1) @ W2 + b2 (one batch tile)."""
    # Static, sublane-aligned views of the resident W1 (free; no wrapper split).
    w1a = w1_ref[:da, :]
    w1b = w1_ref[da:, :]
    # In-kernel cast of activations to the compute dtype (hidden under DMA).
    a = act_ref[...].astype(w1a.dtype)
    t = attr_ref[...].astype(w1a.dtype)
    # Concat fused via split-K: two MXU matmuls into one f32 accumulator.
    h = jnp.dot(a, w1a, preferred_element_type=jnp.float32)
    h = h + jnp.dot(t, w1b, preferred_element_type=jnp.float32)
    h = jnp.maximum(h + b1_ref[...], 0.0)          # bias + ReLU in f32 (VPU)
    # Dropout(p=0.2) is identity at inference time.
    w2 = w2_ref[...]
    y = jnp.dot(h.astype(w2.dtype), w2, preferred_element_type=jnp.float32)
    o_ref[...] = (y + b2_ref[...]).astype(o_ref.dtype)


def prepare_fusion_mlp_params(w1, b1, w2, b2, compute_dtype=jnp.float32):
    """One-time parameter prep (call at model init, NOT per forward).

    w1:(D,H), w2:(H,O) are nn.Linear.weight.T; b1/b2 may be (H,)/(O,) or 2-D.
    Weights go to the MXU compute dtype; biases stay f32 (added post-matmul).
    """
    return (jnp.asarray(w1).astype(compute_dtype),
            jnp.asarray(b1).reshape(1, -1).astype(jnp.float32),
            jnp.asarray(w2).astype(compute_dtype),
            jnp.asarray(b2).reshape(1, -1).astype(jnp.float32))


def fusion_mlp(act, attr, w1, b1, w2, b2, *, block_b=1024, out_dtype=None):
    """Batch-tiled fused-MLP pallas_call.

    act:(B,Da) attr:(B,Db); params already prepared by prepare_fusion_mlp_params
    (w1:(Da+Db,H) in compute dtype, b1:(1,H) f32, w2:(H,O), b2:(1,O) f32).
    out_dtype defaults to the compute dtype (== w1.dtype).
    """
    B, Da = act.shape
    Bb, Db = attr.shape
    assert B == Bb
    D = Da + Db
    H = w1.shape[1]
    O = w2.shape[1]
    assert w1.shape == (D, H) and b1.shape == (1, H)
    assert w2.shape == (H, O) and b2.shape == (1, O)

    compute_dtype = w1.dtype
    if out_dtype is None:
        out_dtype = compute_dtype
    out_dtype = jnp.dtype(out_dtype)

    # Sublane multiple for the batch-tiled blocks (8 for 32-bit, 16 for 16-bit).
    min_item = min(jnp.dtype(act.dtype).itemsize,
                   jnp.dtype(attr.dtype).itemsize,
                   out_dtype.itemsize)
    mult = {4: 8, 2: 16, 1: 32}[min_item]

    # Batch tile: up to block_b rows, capped near B/2 so the "parallel" axis
    # has >= 2 grid steps (keeps both v7x TensorCores busy for large B).
    if B <= 2 * mult:
        tm = B
    else:
        tm = min(block_b, _round_up(pl.cdiv(B, 2), mult))
        tm = max(mult, (tm // mult) * mult)
    grid_b = pl.cdiv(B, tm)

    # Explicit scoped-VMEM budget: resident weights + double-buffered IO tiles
    # + f32 hidden intermediate, with 2x headroom (v5e default is only 16 MiB).
    w_item = jnp.dtype(compute_dtype).itemsize
    resident = (D * H + H * O) * w_item + (H + O) * 4
    streamed = 2 * tm * (Da * jnp.dtype(act.dtype).itemsize
                         + Db * jnp.dtype(attr.dtype).itemsize
                         + O * out_dtype.itemsize)
    interm = tm * H * 4 + tm * D * w_item
    vmem_limit = int(min(64 << 20, max(16 << 20, 2 * (resident + streamed + interm))))

    flops = 2 * B * D * H + 2 * B * H * O
    bytes_accessed = (B * Da * jnp.dtype(act.dtype).itemsize
                      + B * Db * jnp.dtype(attr.dtype).itemsize
                      + (D * H + H * O) * w_item + (H + O) * 4
                      + B * O * out_dtype.itemsize)

    kernel = functools.partial(_fusion_mlp_kernel, da=Da)

    return pl.pallas_call(
        kernel,
        out_shape=jax.ShapeDtypeStruct((B, O), out_dtype),
        grid=(grid_b,),
        in_specs=[
            pl.BlockSpec((tm, Da), lambda i: (i, 0)),     # act tile   (streamed)
            pl.BlockSpec((tm, Db), lambda i: (i, 0)),     # attr tile  (streamed)
            pl.BlockSpec((D, H), lambda i: (0, 0)),       # W1         (resident)
            pl.BlockSpec((1, H), lambda i: (0, 0)),       # b1         (resident)
            pl.BlockSpec((H, O), lambda i: (0, 0)),       # W2         (resident)
            pl.BlockSpec((1, O), lambda i: (0, 0)),       # b2         (resident)
        ],
        out_specs=pl.BlockSpec((tm, O), lambda i: (i, 0)),
        compiler_params=pltpu.CompilerParams(
            dimension_semantics=("parallel",),
            vmem_limit_bytes=vmem_limit),
        cost_estimate=pl.CostEstimate(
            flops=flops, transcendentals=0, bytes_accessed=bytes_accessed),
    )(act, attr, w1, b1, w2, b2)


def reference_mlp(act, attr, w1, b1, w2, b2, out_dtype=None):
    """Pure-JAX reference with the same dtype handling as the kernel."""
    cdt = w1.dtype
    if out_dtype is None:
        out_dtype = cdt
    x = jnp.concatenate([act, attr], axis=1).astype(cdt)
    h = jnp.dot(x, w1, preferred_element_type=jnp.float32)
    h = jnp.maximum(h + b1.astype(jnp.float32), 0.0)
    y = jnp.dot(h.astype(cdt), w2, preferred_element_type=jnp.float32)
    return (y + b2.astype(jnp.float32)).astype(out_dtype)


if __name__ == "__main__":
    key = jax.random.PRNGKey(0)
    k_act, k_attr, k_w1, k_b1, k_w2, k_b2 = jax.random.split(key, 6)

    # Small shapes consistent with the module: input_dim = act_dim + attr_dim.
    act_dim, attr_dim = 16, 16
    input_dim = act_dim + attr_dim          # 32
    hidden_dim = 128
    output_dim = 64

    # Deterministic parameter init (Kaiming-uniform-ish scale like nn.Linear).
    w1 = jax.random.uniform(k_w1, (input_dim, hidden_dim), dtype=jnp.float32,
                            minval=-1.0, maxval=1.0) / jnp.sqrt(input_dim)
    b1 = jax.random.uniform(k_b1, (hidden_dim,), dtype=jnp.float32,
                            minval=-1.0, maxval=1.0) / jnp.sqrt(input_dim)
    w2 = jax.random.uniform(k_w2, (hidden_dim, output_dim), dtype=jnp.float32,
                            minval=-1.0, maxval=1.0) / jnp.sqrt(hidden_dim)
    b2 = jax.random.uniform(k_b2, (output_dim,), dtype=jnp.float32,
                            minval=-1.0, maxval=1.0) / jnp.sqrt(hidden_dim)

    # ---- f32 path, single tile (B=8) ----
    B = 8
    act = jax.random.normal(k_act, (B, act_dim), dtype=jnp.float32)
    attr = jax.random.normal(k_attr, (B, attr_dim), dtype=jnp.float32)
    params_f32 = prepare_fusion_mlp_params(w1, b1, w2, b2, jnp.float32)  # once
    out = jax.block_until_ready(fusion_mlp(act, attr, *params_f32))
    ref = reference_mlp(act, attr, *params_f32)
    assert out.shape == (B, output_dim) and out.dtype == jnp.float32
    assert jnp.allclose(out, ref, atol=1e-4, rtol=1e-4), "f32 mismatch vs reference"

    # ---- f32 path, multi-tile grid with a partial last tile (B=72, tm=32) ----
    B2 = 72
    act2 = jax.random.normal(k_act, (B2, act_dim), dtype=jnp.float32)
    attr2 = jax.random.normal(k_attr, (B2, attr_dim), dtype=jnp.float32)
    out2 = jax.block_until_ready(fusion_mlp(act2, attr2, *params_f32, block_b=32))
    ref2 = reference_mlp(act2, attr2, *params_f32)
    assert out2.shape == (B2, output_dim)
    assert jnp.allclose(out2, ref2, atol=1e-4, rtol=1e-4), "tiled f32 mismatch"

    # ---- bf16 compute + bf16 output path (v6e/v7x MXU, halves output HBM) ----
    params_bf16 = prepare_fusion_mlp_params(w1, b1, w2, b2, jnp.bfloat16)  # once
    out_bf = jax.block_until_ready(fusion_mlp(act, attr, *params_bf16))
    ref_bf = reference_mlp(act, attr, *params_bf16)
    assert out_bf.shape == (B, output_dim) and out_bf.dtype == jnp.bfloat16
    assert jnp.allclose(out_bf.astype(jnp.float32), ref_bf.astype(jnp.float32),
                        atol=5e-2, rtol=5e-2), "bf16 mismatch vs reference"

    print("KERNEL_OK")
</pallas_src>

<mosaic_0001>
module attributes {stable_mosaic.version = 11 : i64} {
  func.func @_fusion_mlp_kernel(%arg0: i32, %arg1: memref<8x16xf32, #tpu.memory_space<vmem>>, %arg2: memref<8x16xf32, #tpu.memory_space<vmem>>, %arg3: memref<32x128xf32, #tpu.memory_space<vmem>>, %arg4: memref<1x128xf32, #tpu.memory_space<vmem>>, %arg5: memref<128x64xf32, #tpu.memory_space<vmem>>, %arg6: memref<1x64xf32, #tpu.memory_space<vmem>>, %arg7: memref<8x64xf32, #tpu.memory_space<vmem>>) attributes {dimension_semantics = [#tpu.dimension_semantics<parallel>], iteration_bounds = array<i64: 1>, scalar_prefetch = 0 : i64, scratch_operands = 0 : i64, tpu.core_type = #tpu.core_type<tc>, window_params = [{transform_indices = @transform_0, window_bounds = array<i64: 8, 16>}, {transform_indices = @transform_1, window_bounds = array<i64: 8, 16>}, {pipeline_mode = #tpu.pipeline_mode<synchronous>, transform_indices = @transform_2, window_bounds = array<i64: 32, 128>}, {pipeline_mode = #tpu.pipeline_mode<synchronous>, transform_indices = @transform_3, window_bounds = array<i64: 1, 128>}, {pipeline_mode = #tpu.pipeline_mode<synchronous>, transform_indices = @transform_4, window_bounds = array<i64: 128, 64>}, {pipeline_mode = #tpu.pipeline_mode<synchronous>, transform_indices = @transform_5, window_bounds = array<i64: 1, 64>}, {transform_indices = @transform_6, window_bounds = array<i64: 8, 64>}]} {
    %c0 = arith.constant 0 : index
    %c0_0 = arith.constant 0 : index
    %0 = vector.load %arg3[%c0, %c0_0] : memref<32x128xf32, #tpu.memory_space<vmem>>, vector<16x128xf32>
    %c16 = arith.constant 16 : index
    %c0_1 = arith.constant 0 : index
    %1 = vector.load %arg3[%c16, %c0_1] : memref<32x128xf32, #tpu.memory_space<vmem>>, vector<16x128xf32>
    %c0_2 = arith.constant 0 : index
    %c0_3 = arith.constant 0 : index
    %2 = vector.load %arg1[%c0_2, %c0_3] : memref<8x16xf32, #tpu.memory_space<vmem>>, vector<8x16xf32>
    %c0_4 = arith.constant 0 : index
    %c0_5 = arith.constant 0 : index
    %3 = vector.load %arg2[%c0_4, %c0_5] : memref<8x16xf32, #tpu.memory_space<vmem>>, vector<8x16xf32>
    %cst = arith.constant dense<0.000000e+00> : vector<8x128xf32>
    %4 = tpu.matmul %2, %0, %cst {dimension_numbers = #tpu.dot_dimension_numbers<[1], [0], [0], [1], [0, 0, 1, 1], [], []>} : vector<8x16xf32>, vector<16x128xf32>, vector<8x128xf32> -> vector<8x128xf32>
    %cst_6 = arith.constant dense<0.000000e+00> : vector<8x128xf32>
    %5 = tpu.matmul %3, %1, %cst_6 {dimension_numbers = #tpu.dot_dimension_numbers<[1], [0], [0], [1], [0, 0, 1, 1], [], []>} : vector<8x16xf32>, vector<16x128xf32>, vector<8x128xf32> -> vector<8x128xf32>
    %6 = arith.addf %4, %5 : vector<8x128xf32>
    %c0_7 = arith.constant 0 : index
    %c0_8 = arith.constant 0 : index
    %7 = vector.load %arg4[%c0_7, %c0_8] : memref<1x128xf32, #tpu.memory_space<vmem>>, vector<1x128xf32>
    %8 = vector.broadcast %7 : vector<1x128xf32> to vector<8x128xf32>
    %9 = arith.addf %6, %8 : vector<8x128xf32>
    %cst_9 = arith.constant 0.000000e+00 : f32
    %10 = vector.broadcast %cst_9 : f32 to vector<8x128xf32>
    %11 = arith.maximumf %9, %10 : vector<8x128xf32>
    %c0_10 = arith.constant 0 : index
    %c0_11 = arith.constant 0 : index
    %12 = vector.load %arg5[%c0_10, %c0_11] : memref<128x64xf32, #tpu.memory_space<vmem>>, vector<128x64xf32>
    %cst_12 = arith.constant dense<0.000000e+00> : vector<8x64xf32>
    %13 = tpu.matmul %11, %12, %cst_12 {dimension_numbers = #tpu.dot_dimension_numbers<[1], [0], [0], [1], [0, 0, 1, 1], [], []>} : vector<8x128xf32>, vector<128x64xf32>, vector<8x64xf32> -> vector<8x64xf32>
    %c0_13 = arith.constant 0 : index
    %c0_14 = arith.constant 0 : index
    %14 = vector.load %arg6[%c0_13, %c0_14] : memref<1x64xf32, #tpu.memory_space<vmem>>, vector<1x64xf32>
    %15 = vector.broadcast %14 : vector<1x64xf32> to vector<8x64xf32>
    %16 = arith.addf %13, %15 : vector<8x64xf32>
    %c0_15 = arith.constant 0 : index
    %c0_16 = arith.constant 0 : index
    %17 = vector.load %arg7[%c0_15, %c0_16] : memref<8x64xf32, #tpu.memory_space<vmem>>, vector<8x64xf32>
    tpu.vector_store %arg7[%c0_15, %c0_16], %16 {strides = array<i32>} : memref<8x64xf32, #tpu.memory_space<vmem>>, vector<8x64xf32>,
    return
  }
  func.func @transform_0(%arg0: i32) -> (i32, i32) {
    %c0_i32 = arith.constant 0 : i32
    %c0_i32_0 = arith.constant 0 : i32
    return %arg0, %c0_i32 : i32, i32
  }
  func.func @transform_1(%arg0: i32) -> (i32, i32) {
    %c0_i32 = arith.constant 0 : i32
    %c0_i32_0 = arith.constant 0 : i32
    return %arg0, %c0_i32 : i32, i32
  }
  func.func @transform_2(%arg0: i32) -> (i32, i32) {
    %c0_i32 = arith.constant 0 : i32
    %c0_i32_0 = arith.constant 0 : i32
    %c0_i32_1 = arith.constant 0 : i32
    return %c0_i32, %c0_i32_0 : i32, i32
  }
  func.func @transform_3(%arg0: i32) -> (i32, i32) {
    %c0_i32 = arith.constant 0 : i32
    %c0_i32_0 = arith.constant 0 : i32
    %c0_i32_1 = arith.constant 0 : i32
    return %c0_i32, %c0_i32_0 : i32, i32
  }
  func.func @transform_4(%arg0: i32) -> (i32, i32) {
    %c0_i32 = arith.constant 0 : i32
    %c0_i32_0 = arith.constant 0 : i32
    %c0_i32_1 = arith.constant 0 : i32
    return %c0_i32, %c0_i32_0 : i32, i32
  }
  func.func @transform_5(%arg0: i32) -> (i32, i32) {
    %c0_i32 = arith.constant 0 : i32
    %c0_i32_0 = arith.constant 0 : i32
    %c0_i32_1 = arith.constant 0 : i32
    return %c0_i32, %c0_i32_0 : i32, i32
  }
  func.func @transform_6(%arg0: i32) -> (i32, i32) {
    %c0_i32 = arith.constant 0 : i32
    %c0_i32_0 = arith.constant 0 : i32
    return %arg0, %c0_i32 : i32, i32
  }
}

</mosaic_0001>

<llo_original>
// kernel: tpu_custom_call.1
$region0: #{tpu_custom_call.1}
  #allocation0 [shape = 'u32[]', space=smem, size = 0x4, offset = 0x4, fixed_abs, tag = 'smem constant byte address 0x4 - core index']
  #allocation1 [shape = 'u32[72,128]{1,0:T(1,128)}', space=vmem, size = 0x9000, scoped, tag = 'internal scratch']
  %s0 = inlined_call_operand.vmem [shape: f32[8,16], index: 0, kind: input, shape index: {}]
  %s1 = inlined_call_operand.vmem [shape: f32[8,16], index: 1, kind: input, shape index: {}]
  %s2 = inlined_call_operand.vmem [shape: f32[32,128], index: 2, kind: input, shape index: {}]
  %s3 = inlined_call_operand.vmem [shape: f32[1,128], index: 3, kind: input, shape index: {}]
  %s4 = inlined_call_operand.vmem [shape: f32[128,64], index: 4, kind: input, shape index: {}]
  %s5 = inlined_call_operand.vmem [shape: f32[1,64], index: 5, kind: input, shape index: {}]
  %s6 = inlined_call_operand.hbm [shape: f32[8,64], index: 6, kind: output, shape index: {}]
  %s7 = sld [smem:[#allocation0]]
  $region34: #{tpu_custom_call.1} parent=0
    _
  %s9 = ssub.s32 1, %s7
  %s10 = scalar_select 0, %s9, %s7
  $region1: #{tpu_custom_call.1} parent=0
    #allocation2 [shape = 'u8[4096]{0}', space=vmem, size = 0x1000, scoped, tag = 'output window, operand 0, single buffered']
    #allocation3 [shape = 's32[1]{0}', space=sflag, size = 0x4, scoped, tag = 'scoped memory for tpu_custom_call.1']
    %11 = vsyncpa [#allocation3], 0
    // Predicated region
    $region2: #{tpu_custom_call.1} parent=1 // pred_check
      _
    $region3: #{tpu_custom_call.1} parent=1 // pred_check_branch
      %13 = sbr.rel (0) target = $region5
    $region4: #{tpu_custom_call.1} parent=1 // pred_region
      _
    $region5: #{tpu_custom_call.1} parent=1 // pred_fallthru
      _
    // Predicated region
    $region6: #{tpu_custom_call.1} parent=1 // pred_check
      _
    $region7: #{tpu_custom_call.1} parent=1 // pred_check_branch
      %15 = sbr.rel (0) target = $region9
    $region8: #{tpu_custom_call.1} parent=1 // pred_region
      _
    $region9: #{tpu_custom_call.1} parent=1 // pred_fallthru
      _
    // Predicated region
    $region10: #{tpu_custom_call.1} parent=1 // pred_check
      _
    $region11: #{tpu_custom_call.1} parent=1 // pred_check_branch
      %17 = sbr.rel (0) target = $region13
    $region12: #{tpu_custom_call.1} parent=1 // pred_region
      _
    $region13: #{tpu_custom_call.1} parent=1 // pred_fallthru
      _
    // Predicated region
    $region14: #{tpu_custom_call.1} parent=1 // pred_check
      _
    $region15: #{tpu_custom_call.1} parent=1 // pred_check_branch
      %19 = sbr.rel (0) target = $region17
    $region16: #{tpu_custom_call.1} parent=1 // pred_region
      _
    $region17: #{tpu_custom_call.1} parent=1 // pred_fallthru
      _
    // Predicated region
    $region18: #{tpu_custom_call.1} parent=1 // pred_check
      _
    $region19: #{tpu_custom_call.1} parent=1 // pred_check_branch
      %21 = sbr.rel (0) target = $region21
    $region20: #{tpu_custom_call.1} parent=1 // pred_region
      _
    $region21: #{tpu_custom_call.1} parent=1 // pred_fallthru
      _
    // Predicated region
    $region22: #{tpu_custom_call.1} parent=1 // pred_check
      _
    $region23: #{tpu_custom_call.1} parent=1 // pred_check_branch
      %23 = sbr.rel (0) target = $region25
    $region24: #{tpu_custom_call.1} parent=1 // pred_region
      _
    $region25: #{tpu_custom_call.1} parent=1 // pred_fallthru
      _
    %v24 = vld [vmem:[%s2] sm:$0xff]
    %v25 = vld [vmem:[%s2 + $0x8] sm:$0xff]
    %v26 = vld [vmem:[%s2 + $0x10] sm:$0xff]
    %v27 = vld [vmem:[%s2 + $0x18] sm:$0xff]
    %v28 = vld [vmem:[%s0] sm:$0xff]
    %v29 = vld [vmem:[%s1] sm:$0xff]
    %vm30 = vcmask 130048
    %v32 = vsel %vm30, %v29, 0
    %34 = vmatpush.msra.mxu0 0.0
    %35 = vmatpush.msra.mxu0 0.0
    %36 = vmatpush.msra.mxu0 0.0
    %37 = vmatpush.msra.mxu0 0.0
    %38 = vmatpush.msra.mxu0 0.0
    %39 = vmatpush.msra.mxu0 0.0
    %40 = vmatpush.msra.mxu0 0.0
    %41 = vmatpush.msra.mxu0 0.0
    %42 = vmatpush.msra.mxu0 0.0
    %43 = vmatpush.msra.mxu0 0.0
    %44 = vmatpush.msra.mxu0 0.0
    %45 = vmatpush.msra.mxu0 0.0
    %46 = vmatpush.msra.mxu0 0.0
    %47 = vmatpush.msra.mxu0 0.0
    %48 = vmatpush.msra.mxu0 %v27
    %49 = vmatpush.msra.mxu0 %v26
    %50 = vmatmul.f32.gmra.mxu0 %v32
    %v51 = vpop.f32.mrf.mxu0
    %v52 = vadd.f32 0.0, %v51
    %53 = vdwg.mxu0
    %v55 = vsel %vm30, %v28, 0
    %57 = vmatpush.msra.mxu0 0.0
    %58 = vmatpush.msra.mxu0 0.0
    %59 = vmatpush.msra.mxu0 0.0
    %60 = vmatpush.msra.mxu0 0.0
    %61 = vmatpush.msra.mxu0 0.0
    %62 = vmatpush.msra.mxu0 0.0
    %63 = vmatpush.msra.mxu0 0.0
    %64 = vmatpush.msra.mxu0 0.0
    %65 = vmatpush.msra.mxu0 0.0
    %66 = vmatpush.msra.mxu0 0.0
    %67 = vmatpush.msra.mxu0 0.0
    %68 = vmatpush.msra.mxu0 0.0
    %69 = vmatpush.msra.mxu0 0.0
    %70 = vmatpush.msra.mxu0 0.0
    %71 = vmatpush.msra.mxu0 %v25
    %72 = vmatpush.msra.mxu0 %v24
    %73 = vmatmul.f32.gmra.mxu0 %v55
    %v74 = vpop.f32.mrf.mxu0
    %v75 = vadd.f32 %v52, %v74
    %76 = vdwg.mxu0
    %v77 = vld [vmem:[%s3] sm:$0x1]
    %v79 = vperm.slane %v77, 0
    %v81 = vadd.f32 %v75, %v79
    %v82 = vmax.f32 %v81, 0.0
    %v83 = vld [vmem:[%s4] sm:$0xff]
    %v84 = vld [vmem:[%s4 + $0x8] sm:$0xff]
    %v85 = vld [vmem:[%s4 + $0x10] sm:$0xff]
    %v86 = vld [vmem:[%s4 + $0x18] sm:$0xff]
    %v87 = vld [vmem:[%s4 + $0x20] sm:$0xff]
    %v88 = vld [vmem:[%s4 + $0x28] sm:$0xff]
    %v89 = vld [vmem:[%s4 + $0x30] sm:$0xff]
    %v90 = vld [vmem:[%s4 + $0x38] sm:$0xff]
    %v91 = vld [vmem:[%s4 + $0x40] sm:$0xff]
    %v92 = vld [vmem:[%s4 + $0x48] sm:$0xff]
    %v93 = vld [vmem:[%s4 + $0x50] sm:$0xff]
    %v94 = vld [vmem:[%s4 + $0x58] sm:$0xff]
    %v95 = vld [vmem:[%s4 + $0x60] sm:$0xff]
    %v96 = vld [vmem:[%s4 + $0x68] sm:$0xff]
    %v97 = vld [vmem:[%s4 + $0x70] sm:$0xff]
    %v98 = vld [vmem:[%s4 + $0x78] sm:$0xff]
    %v99 = vld [vmem:[%s5] sm:$0x1]
    %v101 = vperm.slane %v99, 0
    %103 = vmatpush.msra.mxu0 %v98
    %104 = vmatpush.msra.mxu0 %v97
    %105 = vmatpush.msra.mxu0 %v96
    %106 = vmatpush.msra.mxu0 %v95
    %107 = vmatpush.msra.mxu0 %v94
    %108 = vmatpush.msra.mxu0 %v93
    %109 = vmatpush.msra.mxu0 %v92
    %110 = vmatpush.msra.mxu0 %v91
    %111 = vmatpush.msra.mxu0 %v90
    %112 = vmatpush.msra.mxu0 %v89
    %113 = vmatpush.msra.mxu0 %v88
    %114 = vmatpush.msra.mxu0 %v87
    %115 = vmatpush.msra.mxu0 %v86
    %116 = vmatpush.msra.mxu0 %v85
    %117 = vmatpush.msra.mxu0 %v84
    %118 = vmatpush.msra.mxu0 %v83
    %119 = vmatmul.f32.gmra.mxu0 %v82
    %v120 = vpop.f32.mrf.mxu0
    %v121 = vadd.f32 %v101, %v120
    %122 = vdwg.mxu0
    %vm123 = vcmask 523264
    %124 = vst.msk [vmem:[#allocation2] sm:$0xff] %vm123, %v121
    // Predicated region
    $region26: #{tpu_custom_call.1} parent=1 // pred_check
      _
    $region27: #{tpu_custom_call.1} parent=1 // pred_check_branch
      %126 = sbr.rel (0) target = $region29
    $region28: #{tpu_custom_call.1} parent=1 // pred_region
      %128 = vsyncadd [#allocation3], 0
      %s130 = sshll.u32 [#allocation2], 4
      %s131 = int_to_ptr.vmem [resolvable:$true] %s130
      %s132 = sshll.u32 %s6, 4
      %s133 = int_to_ptr.hbm [resolvable:$true] %s132
      %135 = dma.vmem_to_hbm [thread:$0]  %s131, 128, %s133, [#allocation3]
    $region29: #{tpu_custom_call.1} parent=1 // pred_fallthru
      _
    // Predicated region
    $region30: #{tpu_custom_call.1} parent=1 // pred_check
      _
    $region31: #{tpu_custom_call.1} parent=1 // pred_check_branch
      %137 = sbr.rel (0) target = $region33
    $region32: #{tpu_custom_call.1} parent=1 // pred_region
      %139 = dma.done [#allocation3], 128
    $region33: #{tpu_custom_call.1} parent=1 // pred_fallthru
      _
    %140 = vsyncpa [#allocation3], 1

</llo_original>
